<compile_context>
chip_gen: v7x
topology: tpu7x:2x2x1
jax: 0.10.0
libtpu: 0.0.40
codegen_flags: <defaults>
</compile_context>

<pallas_src>
import functools
import math

import jax
import jax.numpy as jnp
from jax.experimental import pallas as pl
from jax.experimental.pallas import tpu as pltpu

LANE = 128
TILE_ROWS = 2048          # (2048, 128) f32 tile = 1 MiB


def _hinge_elem(x, min_bound, max_bound):
    """Elementwise hinge penalty in f32 (static python bounds -> traced once)."""
    loss = jnp.zeros_like(x)
    if min_bound is not None:
        mb = jnp.float32(min_bound)
        loss = loss + jnp.where(x < mb, (mb - x) ** 2, jnp.float32(0.0))
    if max_bound is not None:
        xb = jnp.float32(max_bound)
        loss = loss + jnp.where(x > xb, (xb - x) ** 2, jnp.float32(0.0))
    return loss


def _hinge_partial_sum_kernel(x_ref, o_ref, *, min_bound, max_bound,
                              n_valid, tile_rows, needs_mask):
    """Each grid step writes its own (1, 1, 128) per-lane partial sum."""
    x = x_ref[...].astype(jnp.float32)
    loss = _hinge_elem(x, min_bound, max_bound)
    if needs_mask:
        i = pl.program_id(0)
        row = jax.lax.broadcasted_iota(jnp.int32, x.shape, 0) + i * tile_rows
        col = jax.lax.broadcasted_iota(jnp.int32, x.shape, 1)
        elem = row * LANE + col
        loss = jnp.where(elem < n_valid, loss, jnp.float32(0.0))
    # Reduce over rows only: mostly VPU adds + one sublane reduce per 1 MiB tile.
    o_ref[...] = jnp.sum(loss, axis=0, keepdims=True).reshape(1, 1, LANE)


def _hinge_none_kernel(x_ref, o_ref, *, min_bound, max_bound, loss_weight):
    x = x_ref[...].astype(jnp.float32)
    loss = _hinge_elem(x, min_bound, max_bound) * jnp.float32(loss_weight)
    o_ref[...] = loss.astype(o_ref.dtype)


class HingeLoss:
    """JAX/Pallas equivalent of the PyTorch HingeLoss module."""

    def __init__(self, reduction='mean', loss_weight=1.0,
                 max_bound=None, min_bound=None):
        assert reduction in ('none', 'mean', 'sum')
        self.reduction = reduction
        self.loss_weight = loss_weight
        self.max_bound = max_bound
        self.min_bound = min_bound

    def __call__(self, pred, loss_weight_override=None, reduction_override=None):
        assert reduction_override in (None, 'none', 'mean', 'sum')
        reduction = reduction_override if reduction_override else self.reduction
        loss_weight = (loss_weight_override
                       if loss_weight_override is not None else self.loss_weight)
        static_weight = isinstance(loss_weight, (int, float))

        orig_shape = pred.shape
        orig_dtype = pred.dtype
        n = int(math.prod(orig_shape)) if orig_shape else 1

        flat = pred.reshape(-1)                  # view / free
        rows = -(-n // LANE)                     # cdiv
        pad = rows * LANE - n
        if pad:
            # TODO(synk): rare ragged-lane fallback (N % 128 != 0) costs one
            # extra HBM pass; masked in-kernel so the pad value is irrelevant.
            flat = jnp.concatenate(
                [flat, jnp.zeros((pad,), dtype=flat.dtype)])
        x2d = flat.reshape(rows, LANE)

        tile_rows = min(TILE_ROWS, rows)         # full dims or multiple of 8
        num_tiles = -(-rows // tile_rows)
        needs_mask = (pad != 0) or (rows % tile_rows != 0)

        if reduction in ('mean', 'sum'):
            kernel = functools.partial(
                _hinge_partial_sum_kernel,
                min_bound=self.min_bound, max_bound=self.max_bound,
                n_valid=n, tile_rows=tile_rows, needs_mask=needs_mask)
            partials = pl.pallas_call(
                kernel,
                out_shape=jax.ShapeDtypeStruct((num_tiles, 1, LANE), jnp.float32),
                grid=(num_tiles,),
                in_specs=[pl.BlockSpec((tile_rows, LANE), lambda i: (i, 0))],
                out_specs=pl.BlockSpec((1, 1, LANE), lambda i: (i, 0, 0)),
                compiler_params=pltpu.CompilerParams(
                    dimension_semantics=("parallel",)),
            )(x2d)
            total = jnp.sum(partials)            # tiny: num_tiles * 128 f32
            if reduction == 'mean':
                total = total / jnp.float32(n)
            if static_weight:
                return total * jnp.float32(loss_weight)
            return total * loss_weight

        # reduction == 'none': elementwise loss, same shape as pred.
        out_dtype = (orig_dtype if jnp.issubdtype(orig_dtype, jnp.floating)
                     else jnp.float32)
        kernel = functools.partial(
            _hinge_none_kernel,
            min_bound=self.min_bound, max_bound=self.max_bound,
            loss_weight=float(loss_weight) if static_weight else 1.0)
        out2d = pl.pallas_call(
            kernel,
            out_shape=jax.ShapeDtypeStruct((rows, LANE), out_dtype),
            grid=(num_tiles,),
            in_specs=[pl.BlockSpec((tile_rows, LANE), lambda i: (i, 0))],
            out_specs=pl.BlockSpec((tile_rows, LANE), lambda i: (i, 0)),
            compiler_params=pltpu.CompilerParams(
                dimension_semantics=("parallel",)),
        )(x2d)
        loss = out2d.reshape(-1)
        if pad:
            loss = loss[:n]
        loss = loss.reshape(orig_shape)
        if not static_weight:
            loss = loss * loss_weight
        return loss


def _reference(pred, min_bound, max_bound, reduction, loss_weight):
    pred = pred.astype(jnp.float32)
    loss = jnp.zeros_like(pred)
    if min_bound is not None:
        loss = loss + (min_bound - pred) ** 2 * (pred < min_bound)
    if max_bound is not None:
        loss = loss + (max_bound - pred) ** 2 * (pred > max_bound)
    if reduction == 'mean':
        loss = loss.mean()
    elif reduction == 'sum':
        loss = loss.sum()
    return loss * loss_weight


if __name__ == "__main__":
    key = jax.random.PRNGKey(0)
    pred = jax.random.normal(key, (2, 4, 16, 16), dtype=jnp.float32)

    min_bound, max_bound, loss_weight = -0.5, 0.5, 2.0

    # mean reduction
    mod_mean = HingeLoss(reduction='mean', loss_weight=loss_weight,
                         max_bound=max_bound, min_bound=min_bound)
    out_mean = jax.block_until_ready(mod_mean(pred))
    ref_mean = _reference(pred, min_bound, max_bound, 'mean', loss_weight)
    assert jnp.allclose(out_mean, ref_mean, rtol=1e-5, atol=1e-6), (out_mean, ref_mean)

    # sum reduction (via override)
    out_sum = jax.block_until_ready(mod_mean(pred, reduction_override='sum'))
    ref_sum = _reference(pred, min_bound, max_bound, 'sum', loss_weight)
    assert jnp.allclose(out_sum, ref_sum, rtol=1e-5, atol=1e-5), (out_sum, ref_sum)

    # none reduction, min_bound only
    mod_none = HingeLoss(reduction='none', loss_weight=0.5, min_bound=0.0)
    out_none = jax.block_until_ready(mod_none(pred))
    ref_none = _reference(pred, 0.0, None, 'none', 0.5)
    assert out_none.shape == pred.shape
    assert jnp.allclose(out_none, ref_none, rtol=1e-5, atol=1e-6)

    # ragged shape (N % 128 != 0): exercises the lane-tail mask + slice path
    pred_r = jax.random.normal(jax.random.PRNGKey(1), (3, 5, 7), dtype=jnp.float32)
    out_r = jax.block_until_ready(mod_mean(pred_r, reduction_override='sum'))
    ref_r = _reference(pred_r, min_bound, max_bound, 'sum', loss_weight)
    assert jnp.allclose(out_r, ref_r, rtol=1e-5, atol=1e-5), (out_r, ref_r)
    out_rn = jax.block_until_ready(mod_none(pred_r))
    ref_rn = _reference(pred_r, 0.0, None, 'none', 0.5)
    assert out_rn.shape == pred_r.shape
    assert jnp.allclose(out_rn, ref_rn, rtol=1e-5, atol=1e-6)

    # multi-tile case with a partial last row-tile: exercises edge-block masking
    pred_b = jax.random.normal(jax.random.PRNGKey(2), (40, 80, 100), dtype=jnp.float32)
    out_b = jax.block_until_ready(mod_mean(pred_b))
    ref_b = _reference(pred_b, min_bound, max_bound, 'mean', loss_weight)
    assert jnp.allclose(out_b, ref_b, rtol=1e-4, atol=1e-5), (out_b, ref_b)

    print("KERNEL_OK")
</pallas_src>

<mosaic_0001>
module attributes {stable_mosaic.version = 11 : i64} {
  func.func @_hinge_partial_sum_kernel(%arg0: i32, %arg1: memref<16x128xf32, #tpu.memory_space<vmem>>, %arg2: memref<1x1x128xf32, #tpu.memory_space<vmem>>) attributes {dimension_semantics = [#tpu.dimension_semantics<parallel>], iteration_bounds = array<i64: 1>, scalar_prefetch = 0 : i64, scratch_operands = 0 : i64, tpu.core_type = #tpu.core_type<tc>, window_params = [{transform_indices = @transform_0, window_bounds = array<i64: 16, 128>}, {transform_indices = @transform_1, window_bounds = array<i64: 1, 1, 128>}]} {
    %c0 = arith.constant 0 : index
    %c0_0 = arith.constant 0 : index
    %0 = vector.load %arg1[%c0, %c0_0] : memref<16x128xf32, #tpu.memory_space<vmem>>, vector<16x128xf32>
    %cst = arith.constant 0.000000e+00 : f32
    %1 = vector.broadcast %cst : f32 to vector<16x128xf32>
    %cst_1 = arith.constant -5.000000e-01 : f32
    %2 = vector.broadcast %cst_1 : f32 to vector<16x128xf32>
    %3 = arith.cmpf olt, %0, %2 : vector<16x128xf32>
    %cst_2 = arith.constant -5.000000e-01 : f32
    %4 = vector.broadcast %cst_2 : f32 to vector<16x128xf32>
    %5 = arith.subf %4, %0 : vector<16x128xf32>
    %6 = arith.mulf %5, %5 : vector<16x128xf32>
    %cst_3 = arith.constant 0.000000e+00 : f32
    %7 = vector.broadcast %cst_3 : f32 to vector<16x128xf32>
    %8 = arith.select %3, %6, %7 : vector<16x128xi1>, vector<16x128xf32>
    %9 = arith.addf %1, %8 : vector<16x128xf32>
    %cst_4 = arith.constant 5.000000e-01 : f32
    %10 = vector.broadcast %cst_4 : f32 to vector<16x128xf32>
    %11 = arith.cmpf ogt, %0, %10 : vector<16x128xf32>
    %cst_5 = arith.constant 5.000000e-01 : f32
    %12 = vector.broadcast %cst_5 : f32 to vector<16x128xf32>
    %13 = arith.subf %12, %0 : vector<16x128xf32>
    %14 = arith.mulf %13, %13 : vector<16x128xf32>
    %cst_6 = arith.constant 0.000000e+00 : f32
    %15 = vector.broadcast %cst_6 : f32 to vector<16x128xf32>
    %16 = arith.select %11, %14, %15 : vector<16x128xi1>, vector<16x128xf32>
    %17 = arith.addf %9, %16 : vector<16x128xf32>
    %cst_7 = arith.constant dense<0.000000e+00> : vector<128xf32>
    %18 = vector.multi_reduction <add>, %17, %cst_7 [0] : vector<16x128xf32> to vector<128xf32>
    %19 = vector.shape_cast %18 : vector<128xf32> to vector<1x128xf32>
    %20 = vector.shape_cast %19 : vector<1x128xf32> to vector<1x1x128xf32>
    %c0_8 = arith.constant 0 : index
    %c0_9 = arith.constant 0 : index
    %c0_10 = arith.constant 0 : index
    %21 = vector.load %arg2[%c0_8, %c0_9, %c0_10] : memref<1x1x128xf32, #tpu.memory_space<vmem>>, vector<1x1x128xf32>
    tpu.vector_store %arg2[%c0_8, %c0_9, %c0_10], %20 {strides = array<i32>} : memref<1x1x128xf32, #tpu.memory_space<vmem>>, vector<1x1x128xf32>,
    return
  }
  func.func @transform_0(%arg0: i32) -> (i32, i32) {
    %c0_i32 = arith.constant 0 : i32
    %c0_i32_0 = arith.constant 0 : i32
    return %arg0, %c0_i32 : i32, i32
  }
  func.func @transform_1(%arg0: i32) -> (i32, i32, i32) {
    %c0_i32 = arith.constant 0 : i32
    %c0_i32_0 = arith.constant 0 : i32
    %c0_i32_1 = arith.constant 0 : i32
    return %arg0, %c0_i32, %c0_i32_0 : i32, i32, i32
  }
}

</mosaic_0001>

<llo_original>
// kernel: tpu_custom_call.1
$region0: #{tpu_custom_call.1}
  #allocation0 [shape = 'u32[]', space=smem, size = 0x4, offset = 0x4, fixed_abs, tag = 'smem constant byte address 0x4 - core index']
  #allocation1 [shape = 'u32[144,128]{1,0:T(1,128)}', space=vmem, size = 0x12000, scoped, tag = 'internal scratch']
  %s0 = inlined_call_operand.hbm [shape: f32[16,128], index: 0, kind: input, shape index: {}]
  %s1 = inlined_call_operand.hbm [shape: f32[1,1,128], index: 1, kind: output, shape index: {}]
  %s2 = sld [smem:[#allocation0]]
  $region18: #{tpu_custom_call.1} parent=0
    _
  %s4 = ssub.s32 1, %s2
  %s5 = scalar_select 0, %s4, %s2
  $region1: #{tpu_custom_call.1} parent=0
    #allocation2 [shape = 'u8[8192]{0}', space=vmem, size = 0x2000, scoped, tag = 'input window, operand 0, single buffered']
    #allocation3 [shape = 's32[1]{0}', space=sflag, size = 0x4, scoped, tag = 'scoped memory for tpu_custom_call.1']
    #allocation4 [shape = 's32[1]{0}', space=sflag, size = 0x4, scoped, tag = 'scoped memory for tpu_custom_call.1']
    #allocation5 [shape = 'u8[512]{0}', space=vmem, size = 0x400, scoped, tag = 'output window, operand 0, single buffered']
    %6 = vsyncpa [#allocation3], 0
    %7 = vsyncpa [#allocation4], 0
    // Predicated region
    $region2: #{tpu_custom_call.1} parent=1 // pred_check
      _
    $region3: #{tpu_custom_call.1} parent=1 // pred_check_branch
      %9 = sbr.rel (0) target = $region5
    $region4: #{tpu_custom_call.1} parent=1 // pred_region
      %s11 = ssub.s32 256, 256
      %12 = vsyncadd [#allocation3], %s11
      %s13 = sshll.u32 [#allocation2], 4
      %s14 = int_to_ptr.vmem [resolvable:$true] %s13
      %19 = dma.hbm_to_vmem [thread:$0]  %s0, 256, %s14, [#allocation3], 128, 128, 8
    $region5: #{tpu_custom_call.1} parent=1 // pred_fallthru
      _
    // Predicated region
    $region6: #{tpu_custom_call.1} parent=1 // pred_check
      _
    $region7: #{tpu_custom_call.1} parent=1 // pred_check_branch
      %21 = sbr.rel (0) target = $region9
    $region8: #{tpu_custom_call.1} parent=1 // pred_region
      %22 = dma.done [#allocation3], 256
    $region9: #{tpu_custom_call.1} parent=1 // pred_fallthru
      _
    %v23 = vld [vmem:[#allocation2] sm:$0xff]
    %v24 = vld [vmem:[#allocation2 + $0x8] sm:$0xff]
    %vm25 = vcmp.lt.f32.partialorder %v23, -0.5
    %vm26 = vcmp.lt.f32.partialorder %v24, -0.5
    %v27 = vsub.f32 -0.5, %v23
    %v28 = vsub.f32 -0.5, %v24
    %v29 = vmul.f32 %v27, %v27
    %v30 = vmul.f32 %v28, %v28
    %v31 = vsel %vm25, %v29, 0.0
    %v32 = vsel %vm26, %v30, 0.0
    %v33 = vadd.f32 %v31, 0.0
    %v34 = vadd.f32 %v32, 0.0
    %vm35 = vcmp.gt.f32.partialorder %v23, 0.5
    %vm36 = vcmp.gt.f32.partialorder %v24, 0.5
    %v37 = vsub.f32 0.5, %v23
    %v38 = vsub.f32 0.5, %v24
    %v39 = vmul.f32 %v37, %v37
    %v40 = vmul.f32 %v38, %v38
    %v41 = vsel %vm35, %v39, 0.0
    %v42 = vsel %vm36, %v40, 0.0
    %v43 = vadd.f32 %v33, %v41
    %v44 = vadd.f32 %v34, %v42
    %v45 = vadd.f32 %v43, %v44
    %v46 = vrot.slane %v45, 4
    %v47 = vadd.f32 %v45, %v46
    %v48 = vrot.slane %v47, 2
    %v49 = vadd.f32 %v47, %v48
    %v50 = vrot.slane %v49, 1
    %v51 = vadd.f32 %v49, %v50
    %52 = vst [vmem:[#allocation5] sm:$0x1] %v51
    // Predicated region
    $region10: #{tpu_custom_call.1} parent=1 // pred_check
      _
    $region11: #{tpu_custom_call.1} parent=1 // pred_check_branch
      %54 = sbr.rel (0) target = $region13
    $region12: #{tpu_custom_call.1} parent=1 // pred_region
      %s56 = ssub.s32 16, 16
      %57 = vsyncadd [#allocation4], %s56
      %s59 = sshll.u32 [#allocation5], 4
      %s60 = int_to_ptr.vmem [resolvable:$true] %s59
      %62 = dma.vmem_to_hbm [thread:$0]  %s60, 16, %s1, [#allocation4]
    $region13: #{tpu_custom_call.1} parent=1 // pred_fallthru
      _
    // Predicated region
    $region14: #{tpu_custom_call.1} parent=1 // pred_check
      _
    $region15: #{tpu_custom_call.1} parent=1 // pred_check_branch
      %64 = sbr.rel (0) target = $region17
    $region16: #{tpu_custom_call.1} parent=1 // pred_region
      %65 = dma.done [#allocation4], 16
    $region17: #{tpu_custom_call.1} parent=1 // pred_fallthru
      _
    %66 = vsyncpa [#allocation3], 1
    %67 = vsyncpa [#allocation4], 1

</llo_original>
